<compile_context>
chip_gen: v7x
topology: tpu7x:2x2x1
jax: 0.10.0
libtpu: 0.0.40
codegen_flags: <defaults>
</compile_context>

<pallas_src>
import functools
import math

import jax
import jax.numpy as jnp
from jax.experimental import pallas as pl
from jax.experimental.pallas import tpu as pltpu

HIDDEN = 32          # transformer.d_model
NUM_GROUPS = 32      # GroupNorm(32, hidden_dim)  -> channels per group == 1
NUM_CLASSES = 15     # 14 joints + "no object"
NUM_QUERIES = 8
NUM_DEC_LAYERS = 3   # transformer.decoder.num_layers
GN_EPS = 1e-5        # torch.nn.GroupNorm default eps
NOUT = NUM_CLASSES + 3


# ---------------------------------------------------------------------------
# Fused kernel: one grid step == one (level, batch) segment.
#   input_proj[l] = Conv2d(Cin_l, hidden, 1) + GroupNorm(32, hidden)
#   heads         = [class_embed(hs) | bbox_embed(hs) + ref-add]   (one matmul)
# ---------------------------------------------------------------------------
def _fused_kernel(x_ref, wt_ref, gamma_ref, beta_ref,
                  hs_ref, wh_ref, bh_ref,
                  src_ref, heads_ref, *, hw_list, seg):
    """x_ref: (Cin_tot, SEG) block-diag channels, zero-padded lanes.
    wt_ref: (HIDDEN, Cin_tot).  gamma/beta: (HIDDEN, 1) for this level.
    hs_ref: (L*B*Q, HIDDEN+2) = [hs | reference].  wh_ref: (HIDDEN+2, NOUT).
    src_ref: (HIDDEN, SEG) lane-dense output.  heads_ref: (L*B*Q, NOUT)."""
    l = pl.program_id(0)

    # Per-level constants baked statically (scalar selects, no extra DMA).
    inv_hw = jnp.float32(1.0 / hw_list[0])
    n_pad = jnp.float32(seg - hw_list[0])
    for i in range(1, len(hw_list)):
        inv_hw = jnp.where(l == i, jnp.float32(1.0 / hw_list[i]), inv_hw)
        n_pad = jnp.where(l == i, jnp.float32(seg - hw_list[i]), n_pad)

    # 1x1 conv == matmul, lane-dense: channels on sublanes, pixels on lanes.
    y = jnp.dot(wt_ref[...], x_ref[...],
                preferred_element_type=jnp.float32)              # (C, SEG)

    # GroupNorm with cpg == 1: per-channel stats over the valid lanes.
    # Zero-padded lanes contribute 0 to the sums; the conv bias cancels exactly
    # under cpg==1 normalization (and is 0 by init), so it is not added.
    mean = jnp.sum(y, axis=1, keepdims=True) * inv_hw            # (C,1) XLU reduce
    d = y - mean                                                 # padded lanes -> -mean
    ssq = jnp.sum(d * d, axis=1, keepdims=True) - n_pad * (mean * mean)
    var = jnp.maximum(ssq * inv_hw, 0.0)                         # two-pass, clamped
    scale = jax.lax.rsqrt(var + GN_EPS) * gamma_ref[...]         # (C,1)
    src_ref[...] = d * scale + beta_ref[...]                     # unmasked 128-aligned vst

    # Decoder heads: one tiny MXU pass.  The "tmp[..., :2] += reference" add is
    # folded into the matmul via selector rows appended to wh_ref, so this is a
    # single dot + bias and a single store (identical value at every grid step).
    heads_ref[...] = (jnp.dot(hs_ref[...], wh_ref[...],
                              preferred_element_type=jnp.float32) + bh_ref[...])


def deformable_potr_forward(x_pad, wt_cat, gamma_all, beta_all,
                            hs_aug, wh_aug, bh, hw_list, seg):
    """x_pad: (L, B, Cin_tot, SEG), wt_cat: (HIDDEN, Cin_tot),
    gamma/beta: (L, HIDDEN, 1), hs_aug: (LBQ, HIDDEN+2), wh_aug: (HIDDEN+2, NOUT),
    bh: (1, NOUT).  Returns (src_out (L,B,HIDDEN,SEG), heads_out (L,B,LBQ,NOUT))."""
    L, B, cin_tot, _ = x_pad.shape
    lbq, haug = hs_aug.shape
    kernel = functools.partial(_fused_kernel, hw_list=tuple(hw_list), seg=seg)

    flops = 2 * L * B * (HIDDEN * cin_tot * seg + lbq * haug * NOUT)
    bytes_accessed = 4 * (x_pad.size + wt_cat.size + gamma_all.size + beta_all.size
                          + hs_aug.size + wh_aug.size + bh.size
                          + L * B * HIDDEN * seg + L * B * lbq * NOUT)

    return pl.pallas_call(
        kernel,
        out_shape=(
            jax.ShapeDtypeStruct((L, B, HIDDEN, seg), jnp.float32),
            jax.ShapeDtypeStruct((L, B, lbq, NOUT), jnp.float32),
        ),
        grid=(L, B),
        in_specs=[
            pl.BlockSpec((None, None, cin_tot, seg), lambda l, b: (l, b, 0, 0)),
            pl.BlockSpec((HIDDEN, cin_tot), lambda l, b: (0, 0)),
            pl.BlockSpec((None, HIDDEN, 1), lambda l, b: (l, 0, 0)),
            pl.BlockSpec((None, HIDDEN, 1), lambda l, b: (l, 0, 0)),
            pl.BlockSpec((lbq, haug), lambda l, b: (0, 0)),
            pl.BlockSpec((haug, NOUT), lambda l, b: (0, 0)),
            pl.BlockSpec((1, NOUT), lambda l, b: (0, 0)),
        ],
        out_specs=(
            pl.BlockSpec((None, None, HIDDEN, seg), lambda l, b: (l, b, 0, 0)),
            pl.BlockSpec((None, None, lbq, NOUT), lambda l, b: (l, b, 0, 0)),
        ),
        compiler_params=pltpu.CompilerParams(
            dimension_semantics=("parallel", "parallel")),
        cost_estimate=pl.CostEstimate(
            flops=flops, transcendentals=L * B * HIDDEN,
            bytes_accessed=bytes_accessed),
    )(x_pad, wt_cat, gamma_all, beta_all, hs_aug, wh_aug, bh)


def xavier_uniform(key, shape, fan_in, fan_out):
    a = math.sqrt(6.0 / (fan_in + fan_out))
    return jax.random.uniform(key, shape, jnp.float32, -a, a)


if __name__ == "__main__":
    B = 2
    backbone_channels = [4, 8]               # backbone.num_channels (2 levels)
    spatial = [(16, 16), (8, 8)]
    hw_list = [h * w for h, w in spatial]     # [256, 64]
    L = len(backbone_channels)
    cin_tot = sum(backbone_channels)
    SEG = max(128 * pl.cdiv(hw, 128) for hw in hw_list)   # 256 (128-aligned lanes)
    assert HIDDEN == NUM_GROUPS               # cpg == 1 (see TODO at top)

    keys = jax.random.split(jax.random.PRNGKey(0), 12)

    # TODO(synk): backbone + positional encodings are external; feature maps
    # are synthesized deterministically (NCHW).
    feats_nchw = [
        jax.random.normal(keys[0], (B, backbone_channels[0], *spatial[0]), jnp.float32),
        jax.random.normal(keys[1], (B, backbone_channels[1], *spatial[1]), jnp.float32),
    ]

    # ---- input_proj operands: lane-dense (Cin x pixels), block-diag channels ----
    x_pad = jnp.zeros((L, B, cin_tot, SEG), jnp.float32)
    x_levels_raw, w_levels = [], []
    c_off = 0
    for lvl, f in enumerate(feats_nchw):
        cin = f.shape[1]
        hw = hw_list[lvl]
        x_cd = f.reshape(B, cin, hw)                          # NCHW -> (B, Cin, H*W)
        x_levels_raw.append(jnp.transpose(x_cd, (0, 2, 1)))   # (B, HW, Cin) for checks
        x_pad = x_pad.at[lvl, :, c_off:c_off + cin, :hw].set(x_cd)
        # Conv2d(Cin, hidden, 1): xavier_uniform_(gain=1), bias 0
        w_levels.append(xavier_uniform(keys[2 + lvl], (cin, HIDDEN), cin, HIDDEN))
        c_off += cin
    wt_cat = jnp.concatenate(w_levels, axis=0).T              # (HIDDEN, Cin_tot)
    gamma_all = jnp.ones((L, HIDDEN, 1), jnp.float32)          # GN affine defaults
    beta_all = jnp.zeros((L, HIDDEN, 1), jnp.float32)

    # TODO(synk): the deformable transformer is external; hs / references are
    # synthesized deterministically.
    hs = jax.random.normal(keys[6], (NUM_DEC_LAYERS, B, NUM_QUERIES, HIDDEN), jnp.float32)
    init_reference = jax.nn.sigmoid(
        jax.random.normal(keys[7], (B, NUM_QUERIES, 2), jnp.float32))
    inter_references = jax.nn.sigmoid(
        jax.random.normal(keys[8], (NUM_DEC_LAYERS, B, NUM_QUERIES, 2), jnp.float32))
    # reference for lvl 0 is init_reference, lvl>0 is inter_references[lvl-1]
    refs = jnp.concatenate(
        [init_reference[None], inter_references[:NUM_DEC_LAYERS - 1]], axis=0)

    # class_embed: default Linear init, bias = -log((1-0.01)/0.01)
    bound = 1.0 / math.sqrt(HIDDEN)
    wc = jax.random.uniform(keys[9], (HIDDEN, NUM_CLASSES), jnp.float32, -bound, bound)
    bc = jnp.full((1, NUM_CLASSES), -math.log((1 - 0.01) / 0.01), jnp.float32)
    # bbox_embed: MLP(hidden, hidden, 3, 1) == Linear(hidden,3); weight=0, bias[2:]=-2
    wb = jnp.zeros((HIDDEN, 3), jnp.float32)
    bb = jnp.array([[0.0, 0.0, -2.0]], jnp.float32)

    # Fold "tmp[..., :2] += reference" into the heads matmul via selector rows.
    LBQ = NUM_DEC_LAYERS * B * NUM_QUERIES
    hs_flat = hs.reshape(LBQ, HIDDEN)
    refs_flat = refs.reshape(LBQ, 2)
    hs_aug = jnp.concatenate([hs_flat, refs_flat], axis=1)        # (LBQ, HIDDEN+2)
    sel = jnp.zeros((2, NOUT), jnp.float32)
    sel = sel.at[0, NUM_CLASSES].set(1.0).at[1, NUM_CLASSES + 1].set(1.0)
    wh_aug = jnp.concatenate([jnp.concatenate([wc, wb], axis=1), sel], axis=0)
    bh = jnp.concatenate([bc, bb], axis=1)                        # (1, NOUT)

    src_out, heads_out = deformable_potr_forward(
        x_pad, wt_cat, gamma_all, beta_all, hs_aug, wh_aug, bh, hw_list, SEG)
    jax.block_until_ready((src_out, heads_out))

    # un-pad / transpose back to the module's layouts (wrapper-side plumbing)
    srcs = [jnp.transpose(src_out[lvl, :, :, :hw_list[lvl]], (0, 2, 1))
            for lvl in range(L)]                                  # (B, HW, HIDDEN)
    fused_heads = heads_out[0, 0].reshape(NUM_DEC_LAYERS, B, NUM_QUERIES, NOUT)
    outputs_class = fused_heads[..., :NUM_CLASSES]
    outputs_coord = fused_heads[..., NUM_CLASSES:]
    pred_logits = outputs_class[-1]
    pred_coords = outputs_coord[-1]

    # ---- lightweight pure-JAX reference checks (forward-pass semantics) ----
    hp = jax.lax.Precision.HIGHEST

    def ref_conv_gn(x, w):            # x: (B, HW, Cin); bias=0, gamma=1, beta=0, cpg==1
        y = jnp.einsum("bhc,cd->bhd", x, w, precision=hp)
        mean = jnp.mean(y, axis=1, keepdims=True)
        var = jnp.mean((y - mean) ** 2, axis=1, keepdims=True)
        return (y - mean) * jax.lax.rsqrt(var + GN_EPS)

    for lvl in range(L):
        expect = ref_conv_gn(x_levels_raw[lvl], w_levels[lvl])
        assert bool(jnp.allclose(srcs[lvl], expect, atol=1e-3, rtol=1e-3)), lvl

    ref_logits = jnp.einsum("lbqh,hc->lbqc", hs, wc, precision=hp) + bc
    ref_coords = jnp.einsum("lbqh,hc->lbqc", hs, wb, precision=hp) + bb
    ref_coords = ref_coords.at[..., :2].add(refs)
    assert bool(jnp.allclose(pred_logits, ref_logits[-1], atol=1e-3, rtol=1e-3))
    assert bool(jnp.allclose(pred_coords, ref_coords[-1], atol=1e-3, rtol=1e-3))

    assert pred_logits.shape == (B, NUM_QUERIES, NUM_CLASSES)
    assert pred_coords.shape == (B, NUM_QUERIES, 3)
    assert srcs[0].shape == (B, 256, HIDDEN) and srcs[1].shape == (B, 64, HIDDEN)
    print("KERNEL_OK")
</pallas_src>

<mosaic_0001>
module attributes {stable_mosaic.version = 11 : i64} {
  func.func @_fused_kernel(%arg0: i32, %arg1: i32, %arg2: memref<1x1x12x256xf32, #tpu.memory_space<vmem>>, %arg3: memref<32x12xf32, #tpu.memory_space<vmem>>, %arg4: memref<1x32x1xf32, #tpu.memory_space<vmem>>, %arg5: memref<1x32x1xf32, #tpu.memory_space<vmem>>, %arg6: memref<48x34xf32, #tpu.memory_space<vmem>>, %arg7: memref<34x18xf32, #tpu.memory_space<vmem>>, %arg8: memref<1x18xf32, #tpu.memory_space<vmem>>, %arg9: memref<1x1x32x256xf32, #tpu.memory_space<vmem>>, %arg10: memref<1x1x48x18xf32, #tpu.memory_space<vmem>>) attributes {dimension_semantics = [#tpu.dimension_semantics<parallel>, #tpu.dimension_semantics<parallel>], iteration_bounds = array<i64: 2, 2>, scalar_prefetch = 0 : i64, scratch_operands = 0 : i64, tpu.core_type = #tpu.core_type<tc>, window_params = [{transform_indices = @transform_0, window_bounds = array<i64: 1, 1, 12, 256>}, {pipeline_mode = #tpu.pipeline_mode<synchronous>, transform_indices = @transform_1, window_bounds = array<i64: 32, 12>}, {transform_indices = @transform_2, window_bounds = array<i64: 1, 32, 1>}, {transform_indices = @transform_3, window_bounds = array<i64: 1, 32, 1>}, {pipeline_mode = #tpu.pipeline_mode<synchronous>, transform_indices = @transform_4, window_bounds = array<i64: 48, 34>}, {pipeline_mode = #tpu.pipeline_mode<synchronous>, transform_indices = @transform_5, window_bounds = array<i64: 34, 18>}, {pipeline_mode = #tpu.pipeline_mode<synchronous>, transform_indices = @transform_6, window_bounds = array<i64: 1, 18>}, {transform_indices = @transform_7, window_bounds = array<i64: 1, 1, 32, 256>}, {transform_indices = @transform_8, window_bounds = array<i64: 1, 1, 48, 18>}]} {
    %c1_i32 = arith.constant 1 : i32
    %0 = arith.cmpi eq, %arg0, %c1_i32 : i32
    %cst = arith.constant 1.562500e-02 : f32
    %cst_0 = arith.constant 3.906250e-03 : f32
    %1 = arith.select %0, %cst, %cst_0 : f32
    %c1_i32_1 = arith.constant 1 : i32
    %2 = arith.cmpi eq, %arg0, %c1_i32_1 : i32
    %cst_2 = arith.constant 1.920000e+02 : f32
    %cst_3 = arith.constant 0.000000e+00 : f32
    %3 = arith.select %2, %cst_2, %cst_3 : f32
    %c0 = arith.constant 0 : index
    %c0_4 = arith.constant 0 : index
    %4 = vector.load %arg3[%c0, %c0_4] : memref<32x12xf32, #tpu.memory_space<vmem>>, vector<32x12xf32>
    %c0_5 = arith.constant 0 : index
    %c0_6 = arith.constant 0 : index
    %c0_7 = arith.constant 0 : index
    %c0_8 = arith.constant 0 : index
    %5 = vector.load %arg2[%c0_5, %c0_6, %c0_7, %c0_8] : memref<1x1x12x256xf32, #tpu.memory_space<vmem>>, vector<1x1x12x256xf32>
    %6 = vector.shape_cast %5 : vector<1x1x12x256xf32> to vector<12x256xf32>
    %cst_9 = arith.constant dense<0.000000e+00> : vector<32x256xf32>
    %7 = tpu.matmul %4, %6, %cst_9 {dimension_numbers = #tpu.dot_dimension_numbers<[1], [0], [0], [1], [0, 0, 1, 1], [], []>} : vector<32x12xf32>, vector<12x256xf32>, vector<32x256xf32> -> vector<32x256xf32>
    %cst_10 = arith.constant dense<0.000000e+00> : vector<32xf32>
    %8 = vector.multi_reduction <add>, %7, %cst_10 [1] : vector<32x256xf32> to vector<32xf32>
    %9 = vector.shape_cast %8 : vector<32xf32> to vector<32x1xf32>
    %10 = vector.broadcast %1 : f32 to vector<32x1xf32>
    %11 = arith.mulf %9, %10 : vector<32x1xf32>
    %12 = vector.broadcast %11 : vector<32x1xf32> to vector<32x256xf32>
    %13 = arith.subf %7, %12 : vector<32x256xf32>
    %14 = arith.mulf %13, %13 : vector<32x256xf32>
    %cst_11 = arith.constant dense<0.000000e+00> : vector<32xf32>
    %15 = vector.multi_reduction <add>, %14, %cst_11 [1] : vector<32x256xf32> to vector<32xf32>
    %16 = vector.shape_cast %15 : vector<32xf32> to vector<32x1xf32>
    %17 = arith.mulf %11, %11 : vector<32x1xf32>
    %18 = vector.broadcast %3 : f32 to vector<32x1xf32>
    %19 = arith.mulf %18, %17 : vector<32x1xf32>
    %20 = arith.subf %16, %19 : vector<32x1xf32>
    %21 = vector.broadcast %1 : f32 to vector<32x1xf32>
    %22 = arith.mulf %20, %21 : vector<32x1xf32>
    %cst_12 = arith.constant 0.000000e+00 : f32
    %23 = vector.broadcast %cst_12 : f32 to vector<32x1xf32>
    %24 = arith.maximumf %22, %23 : vector<32x1xf32>
    %cst_13 = arith.constant 9.99999974E-6 : f32
    %25 = vector.broadcast %cst_13 : f32 to vector<32x1xf32>
    %26 = arith.addf %24, %25 : vector<32x1xf32>
    %27 = math.rsqrt %26 : vector<32x1xf32>
    %c0_14 = arith.constant 0 : index
    %c0_15 = arith.constant 0 : index
    %c0_16 = arith.constant 0 : index
    %28 = vector.load %arg4[%c0_14, %c0_15, %c0_16] : memref<1x32x1xf32, #tpu.memory_space<vmem>>, vector<1x32x1xf32>
    %29 = vector.shape_cast %28 : vector<1x32x1xf32> to vector<32x1xf32>
    %30 = arith.mulf %27, %29 : vector<32x1xf32>
    %31 = vector.broadcast %30 : vector<32x1xf32> to vector<32x256xf32>
    %32 = arith.mulf %13, %31 : vector<32x256xf32>
    %c0_17 = arith.constant 0 : index
    %c0_18 = arith.constant 0 : index
    %c0_19 = arith.constant 0 : index
    %33 = vector.load %arg5[%c0_17, %c0_18, %c0_19] : memref<1x32x1xf32, #tpu.memory_space<vmem>>, vector<1x32x1xf32>
    %34 = vector.shape_cast %33 : vector<1x32x1xf32> to vector<32x1xf32>
    %35 = vector.broadcast %34 : vector<32x1xf32> to vector<32x256xf32>
    %36 = arith.addf %32, %35 : vector<32x256xf32>
    %c0_20 = arith.constant 0 : index
    %c0_21 = arith.constant 0 : index
    %c0_22 = arith.constant 0 : index
    %c0_23 = arith.constant 0 : index
    %37 = vector.load %arg9[%c0_20, %c0_21, %c0_22, %c0_23] : memref<1x1x32x256xf32, #tpu.memory_space<vmem>>, vector<1x1x32x256xf32>
    %38 = vector.shape_cast %37 : vector<1x1x32x256xf32> to vector<32x256xf32>
    %39 = vector.shape_cast %36 : vector<32x256xf32> to vector<1x1x32x256xf32>
    tpu.vector_store %arg9[%c0_20, %c0_21, %c0_22, %c0_23], %39 {strides = array<i32>} : memref<1x1x32x256xf32, #tpu.memory_space<vmem>>, vector<1x1x32x256xf32>,
    %c0_24 = arith.constant 0 : index
    %c0_25 = arith.constant 0 : index
    %40 = vector.load %arg6[%c0_24, %c0_25] : memref<48x34xf32, #tpu.memory_space<vmem>>, vector<48x34xf32>
    %c0_26 = arith.constant 0 : index
    %c0_27 = arith.constant 0 : index
    %41 = vector.load %arg7[%c0_26, %c0_27] : memref<34x18xf32, #tpu.memory_space<vmem>>, vector<34x18xf32>
    %cst_28 = arith.constant dense<0.000000e+00> : vector<48x18xf32>
    %42 = tpu.matmul %40, %41, %cst_28 {dimension_numbers = #tpu.dot_dimension_numbers<[1], [0], [0], [1], [0, 0, 1, 1], [], []>} : vector<48x34xf32>, vector<34x18xf32>, vector<48x18xf32> -> vector<48x18xf32>
    %c0_29 = arith.constant 0 : index
    %c0_30 = arith.constant 0 : index
    %43 = vector.load %arg8[%c0_29, %c0_30] : memref<1x18xf32, #tpu.memory_space<vmem>>, vector<1x18xf32>
    %44 = vector.broadcast %43 : vector<1x18xf32> to vector<48x18xf32>
    %45 = arith.addf %42, %44 : vector<48x18xf32>
    %c0_31 = arith.constant 0 : index
    %c0_32 = arith.constant 0 : index
    %c0_33 = arith.constant 0 : index
    %c0_34 = arith.constant 0 : index
    %46 = vector.load %arg10[%c0_31, %c0_32, %c0_33, %c0_34] : memref<1x1x48x18xf32, #tpu.memory_space<vmem>>, vector<1x1x48x18xf32>
    %47 = vector.shape_cast %46 : vector<1x1x48x18xf32> to vector<48x18xf32>
    %48 = vector.shape_cast %45 : vector<48x18xf32> to vector<1x1x48x18xf32>
    tpu.vector_store %arg10[%c0_31, %c0_32, %c0_33, %c0_34], %48 {strides = array<i32>} : memref<1x1x48x18xf32, #tpu.memory_space<vmem>>, vector<1x1x48x18xf32>,
    return
  }
  func.func @transform_0(%arg0: i32, %arg1: i32) -> (i32, i32, i32, i32) {
    %c0_i32 = arith.constant 0 : i32
    %c0_i32_0 = arith.constant 0 : i32
    %c0_i32_1 = arith.constant 0 : i32
    return %arg0, %arg1, %c0_i32, %c0_i32_0 : i32, i32, i32, i32
  }
  func.func @transform_1(%arg0: i32, %arg1: i32) -> (i32, i32) {
    %c0_i32 = arith.constant 0 : i32
    %c0_i32_0 = arith.constant 0 : i32
    %c0_i32_1 = arith.constant 0 : i32
    return %c0_i32, %c0_i32_0 : i32, i32
  }
  func.func @transform_2(%arg0: i32, %arg1: i32) -> (i32, i32, i32) {
    %c0_i32 = arith.constant 0 : i32
    %c0_i32_0 = arith.constant 0 : i32
    %c0_i32_1 = arith.constant 0 : i32
    return %arg0, %c0_i32, %c0_i32_0 : i32, i32, i32
  }
  func.func @transform_3(%arg0: i32, %arg1: i32) -> (i32, i32, i32) {
    %c0_i32 = arith.constant 0 : i32
    %c0_i32_0 = arith.constant 0 : i32
    %c0_i32_1 = arith.constant 0 : i32
    return %arg0, %c0_i32, %c0_i32_0 : i32, i32, i32
  }
  func.func @transform_4(%arg0: i32, %arg1: i32) -> (i32, i32) {
    %c0_i32 = arith.constant 0 : i32
    %c0_i32_0 = arith.constant 0 : i32
    %c0_i32_1 = arith.constant 0 : i32
    return %c0_i32, %c0_i32_0 : i32, i32
  }
  func.func @transform_5(%arg0: i32, %arg1: i32) -> (i32, i32) {
    %c0_i32 = arith.constant 0 : i32
    %c0_i32_0 = arith.constant 0 : i32
    %c0_i32_1 = arith.constant 0 : i32
    return %c0_i32, %c0_i32_0 : i32, i32
  }
  func.func @transform_6(%arg0: i32, %arg1: i32) -> (i32, i32) {
    %c0_i32 = arith.constant 0 : i32
    %c0_i32_0 = arith.constant 0 : i32
    %c0_i32_1 = arith.constant 0 : i32
    return %c0_i32, %c0_i32_0 : i32, i32
  }
  func.func @transform_7(%arg0: i32, %arg1: i32) -> (i32, i32, i32, i32) {
    %c0_i32 = arith.constant 0 : i32
    %c0_i32_0 = arith.constant 0 : i32
    %c0_i32_1 = arith.constant 0 : i32
    return %arg0, %arg1, %c0_i32, %c0_i32_0 : i32, i32, i32, i32
  }
  func.func @transform_8(%arg0: i32, %arg1: i32) -> (i32, i32, i32, i32) {
    %c0_i32 = arith.constant 0 : i32
    %c0_i32_0 = arith.constant 0 : i32
    %c0_i32_1 = arith.constant 0 : i32
    return %arg0, %arg1, %c0_i32, %c0_i32_0 : i32, i32, i32, i32
  }
}

</mosaic_0001>

<llo_original>
// kernel: tpu_custom_call.1
$region0: #{tpu_custom_call.1}
  #allocation0 [shape = 'u32[]', space=smem, size = 0x4, offset = 0x4, fixed_abs, tag = 'smem constant byte address 0x4 - core index']
  #allocation1 [shape = 'u32[144,128]{1,0:T(1,128)}', space=vmem, size = 0x12000, scoped, tag = 'internal scratch']
  %s0 = inlined_call_operand.vmem [shape: f32[2,2,12,256], index: 0, kind: input, shape index: {}]
  %s1 = inlined_call_operand.vmem [shape: f32[32,12], index: 1, kind: input, shape index: {}]
  %s2 = inlined_call_operand.vmem [shape: f32[2,32,1], index: 2, kind: input, shape index: {}]
  %s3 = inlined_call_operand.vmem [shape: f32[2,32,1], index: 3, kind: input, shape index: {}]
  %s4 = inlined_call_operand.vmem [shape: f32[48,34], index: 4, kind: input, shape index: {}]
  %s5 = inlined_call_operand.vmem [shape: f32[34,18], index: 5, kind: input, shape index: {}]
  %s6 = inlined_call_operand.vmem [shape: f32[1,18], index: 6, kind: input, shape index: {}]
  %s7 = inlined_call_operand.hbm [shape: f32[2,2,32,256], index: 7, kind: output, shape index: {0}]
  %s8 = inlined_call_operand.vmem [shape: f32[2,2,48,18], index: 8, kind: output, shape index: {1}]
  %9 = xla_tuple %s7, %s8
  %s10 = sld [smem:[#allocation0]]
  $region69: #{tpu_custom_call.1} parent=0
    _
  %s12 = ssub.s32 1, %s10
  %s13 = scalar_select 0, %s12, %s10
  $region1: #{tpu_custom_call.1} parent=0
    #allocation2 [shape = 'u8[65536]{0}', space=vmem, size = 0x10000, scoped, tag = 'output window, operand 0']
    #allocation3 [shape = 's32[2]{0}', space=sflag, size = 0x8, scoped, tag = 'scoped memory for tpu_custom_call.1']
    %14 = vsyncpa [#allocation3], 0
    %s15 = scalar_lea.sflag [#allocation3], 1
    %16 = vsyncpa %s15, 0
    loop: start=0, step=1, limit=6
    $region2: #{tpu_custom_call.1} parent=1 // loop_pre_header
      _
    $region3: #{tpu_custom_call.1} parent=1 // loop_header
      %s18 = sphi 0, %s22
      %p19 = scmp.ge.s32.totalorder %s18, 6
      %s25 = sphi 0, %s37
      %s26 = sphi 0, %s33
      %s27 = sphi 0, %s25
      %s28 = sphi 0, %s26
      %s29 = sphi 0, %s27
      %s30 = sphi 0, %s28
      %s42 = sphi 0, %s44
      %s45 = sphi 0, %s42
      %s46 = sphi 0, %s45
      %s62 = sphi 0, %s46
      %s66 = sphi 0, %s66
      %s68 = sphi 0, %s66
      %s69 = sphi 0, %s68
      %s83 = sphi 0, %s69
      %s89 = sphi 0, %s91
      %s92 = sphi 0, %s89
      %s93 = sphi 0, %s92
      %s109 = sphi 0, %s93
      %s115 = sphi 0, %s117
      %s118 = sphi 0, %s115
      %s119 = sphi 0, %s118
      %s135 = sphi 0, %s119
      %s139 = sphi 0, %s139
      %s141 = sphi 0, %s139
      %s142 = sphi 0, %s141
      %s156 = sphi 0, %s142
      %s160 = sphi 0, %s160
      %s162 = sphi 0, %s160
      %s163 = sphi 0, %s162
      %s177 = sphi 0, %s163
      %s181 = sphi 0, %s181
      %s183 = sphi 0, %s181
      %s184 = sphi 0, %s183
      %s198 = sphi 0, %s184
      %s206 = sphi 0, %s208
      %s209 = sphi 0, %s206
      %s210 = sphi 0, %s209
      %s226 = sphi 0, %s210
      %s234 = sphi 0, %s236
      %s237 = sphi 0, %s234
      %s238 = sphi 0, %s237
      %s254 = sphi 0, %s238
    $region4: #{tpu_custom_call.1} parent=1 // loop_header_branch
      %21 = sbr.rel (%p19) target = $region8
    $region5: #{tpu_custom_call.1} parent=1 // loop_body
      %s23 = ssub.s32 %s18, 1
      %s24 = ssub.s32 %s18, 2
      %s31 = sadd.s32 1, %s26
      %p32 = scmp.ge.s32.totalorder %s31, 2
      %s33 = scalar_select %p32, 0, %s31
      %s34 = sadd.s32 1, %s25
      %s35 = scalar_select %p32, %s34, %s25
      %p36 = scmp.ge.s32.totalorder %s35, 2
      %s37 = scalar_select %p36, 0, %s35
      %s38 = ssub.s32 %s25, %s37
      %s39 = ssub.s32 %s26, %s33
      %s40 = sor.u32 %s38, %s39
      %p41 = scmp.eq.s32.totalorder %s40, 0
      %s43 = sadd.s32 %s42, 1
      %s44 = scalar_select %p41, %s42, %s43
      %p47 = pneg %p41
      %p48 = scmp.eq.s32.totalorder %s18, 3
      %p49 = por %p47, %p48
      %p50 = scmp.ne.s32.totalorder %s42, %s45
      %p51 = scmp.eq.s32.totalorder %s18, 0
      %p52 = por %p50, %p51
      %p53 = scmp.ne.s32.totalorder %s42, %s45
      %p54 = scmp.eq.s32.totalorder %s23, 3
      %p55 = por %p53, %p54
      %p56 = scmp.ne.s32.totalorder %s45, %s46
      %p57 = scmp.eq.s32.totalorder %s23, 0
      %p58 = por %p56, %p57
      %p59 = scmp.ne.s32.totalorder %s45, %s46
      %p60 = scmp.eq.s32.totalorder %s24, 3
      %p61 = por %p59, %p60
      %p63 = scmp.ne.s32.totalorder %s46, %s62
      %p64 = scmp.eq.s32.totalorder %s24, 0
      %p65 = por %p63, %p64
      %s67 = sadd.s32 %s66, 1
      %p70 = scmp.eq.s32.totalorder %s18, 3
      %p71 = scmp.ne.s32.totalorder %s66, %s68
      %p72 = scmp.eq.s32.totalorder %s18, 0
      %p73 = por %p71, %p72
      %p74 = scmp.ne.s32.totalorder %s66, %s68
      %p75 = scmp.eq.s32.totalorder %s23, 3
      %p76 = por %p74, %p75
      %p77 = scmp.ne.s32.totalorder %s68, %s69
      %p78 = scmp.eq.s32.totalorder %s23, 0
      %p79 = por %p77, %p78
      %p80 = scmp.ne.s32.totalorder %s68, %s69
      %p81 = scmp.eq.s32.totalorder %s24, 3
      %p82 = por %p80, %p81
      %p84 = scmp.ne.s32.totalorder %s69, %s83
      %p85 = scmp.eq.s32.totalorder %s24, 0
      %p86 = por %p84, %p85
      %s87 = ssub.s32 %s25, %s37
      %p88 = scmp.eq.s32.totalorder %s87, 0
      %s90 = sadd.s32 %s89, 1
      %s91 = scalar_select %p88, %s89, %s90
      %p94 = pneg %p88
      %p95 = scmp.eq.s32.totalorder %s18, 3
      %p96 = por %p94, %p95
      %p97 = scmp.ne.s32.totalorder %s89, %s92
      %p98 = scmp.eq.s32.totalorder %s18, 0
      %p99 = por %p97, %p98
      %p100 = scmp.ne.s32.totalorder %s89, %s92
      %p101 = scmp.eq.s32.totalorder %s23, 3
      %p102 = por %p100, %p101
      %p103 = scmp.ne.s32.totalorder %s92, %s93
      %p104 = scmp.eq.s32.totalorder %s23, 0
      %p105 = por %p103, %p104
      %p106 = scmp.ne.s32.totalorder %s92, %s93
      %p107 = scmp.eq.s32.totalorder %s24, 3
      %p108 = por %p106, %p107
      %p110 = scmp.ne.s32.totalorder %s93, %s109
      %p111 = scmp.eq.s32.totalorder %s24, 0
      %p112 = por %p110, %p111
      %s113 = ssub.s32 %s25, %s37
      %p114 = scmp.eq.s32.totalorder %s113, 0
      %s116 = sadd.s32 %s115, 1
      %s117 = scalar_select %p114, %s115, %s116
      %p120 = pneg %p114
      %p121 = scmp.eq.s32.totalorder %s18, 3
      %p122 = por %p120, %p121
      %p123 = scmp.ne.s32.totalorder %s115, %s118
      %p124 = scmp.eq.s32.totalorder %s18, 0
      %p125 = por %p123, %p124
      %p126 = scmp.ne.s32.totalorder %s115, %s118
      %p127 = scmp.eq.s32.totalorder %s23, 3
      %p128 = por %p126, %p127
      %p129 = scmp.ne.s32.totalorder %s118, %s119
      %p130 = scmp.eq.s32.totalorder %s23, 0
      %p131 = por %p129, %p130
      %p132 = scmp.ne.s32.totalorder %s118, %s119
      %p133 = scmp.eq.s32.totalorder %s24, 3
      %p134 = por %p132, %p133
      %p136 = scmp.ne.s32.totalorder %s119, %s135
      %p137 = scmp.eq.s32.totalorder %s24, 0
      %p138 = por %p136, %p137
      %s140 = sadd.s32 %s139, 1
      %p143 = scmp.eq.s32.totalorder %s18, 3
      %p144 = scmp.ne.s32.totalorder %s139, %s141
      %p145 = scmp.eq.s32.totalorder %s18, 0
      %p146 = por %p144, %p145
      %p147 = scmp.ne.s32.totalorder %s139, %s141
      %p148 = scmp.eq.s32.totalorder %s23, 3
      %p149 = por %p147, %p148
      %p150 = scmp.ne.s32.totalorder %s141, %s142
      %p151 = scmp.eq.s32.totalorder %s23, 0
      %p152 = por %p150, %p151
      %p153 = scmp.ne.s32.totalorder %s141, %s142
      %p154 = scmp.eq.s32.totalorder %s24, 3
      %p155 = por %p153, %p154
      %p157 = scmp.ne.s32.totalorder %s142, %s156
      %p158 = scmp.eq.s32.totalorder %s24, 0
      %p159 = por %p157, %p158
      %s161 = sadd.s32 %s160, 1
      %p164 = scmp.eq.s32.totalorder %s18, 3
      %p165 = scmp.ne.s32.totalorder %s160, %s162
      %p166 = scmp.eq.s32.totalorder %s18, 0
      %p167 = por %p165, %p166
      %p168 = scmp.ne.s32.totalorder %s160, %s162
      %p169 = scmp.eq.s32.totalorder %s23, 3
      %p170 = por %p168, %p169
      %p171 = scmp.ne.s32.totalorder %s162, %s163
      %p172 = scmp.eq.s32.totalorder %s23, 0
      %p173 = por %p171, %p172
      %p174 = scmp.ne.s32.totalorder %s162, %s163
      %p175 = scmp.eq.s32.totalorder %s24, 3
      %p176 = por %p174, %p175
      %p178 = scmp.ne.s32.totalorder %s163, %s177
      %p179 = scmp.eq.s32.totalorder %s24, 0
      %p180 = por %p178, %p179
      %s182 = sadd.s32 %s181, 1
      %p185 = scmp.eq.s32.totalorder %s18, 3
      %p186 = scmp.ne.s32.totalorder %s181, %s183
      %p187 = scmp.eq.s32.totalorder %s18, 0
      %p188 = por %p186, %p187
      %p189 = scmp.ne.s32.totalorder %s181, %s183
      %p190 = scmp.eq.s32.totalorder %s23, 3
      %p191 = por %p189, %p190
      %p192 = scmp.ne.s32.totalorder %s183, %s184
      %p193 = scmp.eq.s32.totalorder %s23, 0
      %p194 = por %p192, %p193
      %p195 = scmp.ne.s32.totalorder %s183, %s184
      %p196 = scmp.eq.s32.totalorder %s24, 3
      %p197 = por %p195, %p196
      %p199 = scmp.ne.s32.totalorder %s184, %s198
      %p200 = scmp.eq.s32.totalorder %s24, 0
      %p201 = por %p199, %p200
      %s202 = ssub.s32 %s25, %s37
      %s203 = ssub.s32 %s26, %s33
      %s204 = sor.u32 %s202, %s203
      %p205 = scmp.eq.s32.totalorder %s204, 0
      %s207 = sadd.s32 %s206, 1
      %s208 = scalar_select %p205, %s206, %s207
      %p211 = pneg %p205
      %p212 = scmp.eq.s32.totalorder %s18, 3
      %p213 = por %p211, %p212
      %p214 = scmp.ne.s32.totalorder %s206, %s209
      %p215 = scmp.eq.s32.totalorder %s18, 0
      %p216 = por %p214, %p215
      %p217 = scmp.ne.s32.totalorder %s206, %s209
      %p218 = scmp.eq.s32.totalorder %s23, 3
      %p219 = por %p217, %p218
      %p220 = scmp.ne.s32.totalorder %s209, %s210
      %p221 = scmp.eq.s32.totalorder %s23, 0
      %p222 = por %p220, %p221
      %p223 = scmp.ne.s32.totalorder %s209, %s210
      %p224 = scmp.eq.s32.totalorder %s24, 3
      %p225 = por %p223, %p224
      %p227 = scmp.ne.s32.totalorder %s210, %s226
      %p228 = scmp.eq.s32.totalorder %s24, 0
      %p229 = por %p227, %p228
      %s230 = ssub.s32 %s25, %s37
      %s231 = ssub.s32 %s26, %s33
      %s232 = sor.u32 %s230, %s231
      %p233 = scmp.eq.s32.totalorder %s232, 0
      %s235 = sadd.s32 %s234, 1
      %s236 = scalar_select %p233, %s234, %s235
      %p239 = pneg %p233
      %p240 = scmp.eq.s32.totalorder %s18, 3
      %p241 = por %p239, %p240
      %p242 = scmp.ne.s32.totalorder %s234, %s237
      %p243 = scmp.eq.s32.totalorder %s18, 0
      %p244 = por %p242, %p243
      %p245 = scmp.ne.s32.totalorder %s234, %s237
      %p246 = scmp.eq.s32.totalorder %s23, 3
      %p247 = por %p245, %p246
      %p248 = scmp.ne.s32.totalorder %s237, %s238
      %p249 = scmp.eq.s32.totalorder %s23, 0
      %p250 = por %p248, %p249
      %p251 = scmp.ne.s32.totalorder %s237, %s238
      %p252 = scmp.eq.s32.totalorder %s24, 3
      %p253 = por %p251, %p252
      %p255 = scmp.ne.s32.totalorder %s238, %s254
      %p256 = scmp.eq.s32.totalorder %s24, 0
      %p257 = por %p255, %p256
      %p258 = scmp.le.s32.totalorder 1, %s18
      %p259 = scmp.lt.s32.totalorder %s18, 5
      %p260 = pnand %p258, %p259
      %p261 = pneg %p260
      // Predicated region
      $region9: #{tpu_custom_call.1} parent=5 // pred_check
        _
      $region10: #{tpu_custom_call.1} parent=5 // pred_check_branch
        %263 = sbr.rel (%p260) target = $region12
      $region11: #{tpu_custom_call.1} parent=5 // pred_region
        %s264 = ssub.s32 %s18, 1
        // Predicated region
        $region13: #{tpu_custom_call.1} parent=11 // pred_check
          %p265 = pneg %p79
        $region14: #{tpu_custom_call.1} parent=11 // pred_check_branch
          %267 = sbr.rel (%p265) target = $region16
        $region15: #{tpu_custom_call.1} parent=11 // pred_region
          _
        $region16: #{tpu_custom_call.1} parent=11 // pred_fallthru
          _
        // Predicated region
        $region17: #{tpu_custom_call.1} parent=11 // pred_check
          %p268 = pneg %p152
        $region18: #{tpu_custom_call.1} parent=11 // pred_check_branch
          %270 = sbr.rel (%p268) target = $region20
        $region19: #{tpu_custom_call.1} parent=11 // pred_region
          _
        $region20: #{tpu_custom_call.1} parent=11 // pred_fallthru
          _
        // Predicated region
        $region21: #{tpu_custom_call.1} parent=11 // pred_check
          %p271 = pneg %p173
        $region22: #{tpu_custom_call.1} parent=11 // pred_check_branch
          %273 = sbr.rel (%p271) target = $region24
        $region23: #{tpu_custom_call.1} parent=11 // pred_region
          _
        $region24: #{tpu_custom_call.1} parent=11 // pred_fallthru
          _
        // Predicated region
        $region25: #{tpu_custom_call.1} parent=11 // pred_check
          %p274 = pneg %p194
        $region26: #{tpu_custom_call.1} parent=11 // pred_check_branch
          %276 = sbr.rel (%p274) target = $region28
        $region27: #{tpu_custom_call.1} parent=11 // pred_region
          _
        $region28: #{tpu_custom_call.1} parent=11 // pred_fallthru
          _
      $region12: #{tpu_custom_call.1} parent=5 // pred_fallthru
        _
      %p277 = scmp.lt.s32.totalorder %s18, 4
      // Predicated region
      $region29: #{tpu_custom_call.1} parent=5 // pred_check
        %p278 = pneg %p277
      $region30: #{tpu_custom_call.1} parent=5 // pred_check_branch
        %280 = sbr.rel (%p278) target = $region32
      $region31: #{tpu_custom_call.1} parent=5 // pred_region
        // Predicated region
        $region33: #{tpu_custom_call.1} parent=31 // pred_check
          %p281 = pneg %p52
        $region34: #{tpu_custom_call.1} parent=31 // pred_check_branch
          %283 = sbr.rel (%p281) target = $region36
        $region35: #{tpu_custom_call.1} parent=31 // pred_region
          %p284 = scmp.lt.s32.totalorder %s25, 1
          %s285 = scalar_select %p284, %s25, 1
          %p286 = scmp.lt.s32.totalorder %s26, 1
          %s287 = scalar_select %p286, %s26, 1
          %s288 = smul.addr %s287, 4
          %s289 = smul.addr %s285, 8
          %s290 = sadd.s32 %s288, %s289
          %s291 = smul.addr %s290, 8
          %s292 = scalar_lea.vmem %s0, %s291
        $region36: #{tpu_custom_call.1} parent=31 // pred_fallthru
          _
        // Predicated region
        $region37: #{tpu_custom_call.1} parent=31 // pred_check
          %p293 = pneg %p99
        $region38: #{tpu_custom_call.1} parent=31 // pred_check_branch
          %295 = sbr.rel (%p293) target = $region40
        $region39: #{tpu_custom_call.1} parent=31 // pred_region
          %p296 = scmp.lt.s32.totalorder %s25, 1
          %s297 = scalar_select %p296, %s25, 1
          %s298 = smul.addr %s297, 4
          %s299 = smul.addr %s298, 8
          %s300 = scalar_lea.vmem %s2, %s299
        $region40: #{tpu_custom_call.1} parent=31 // pred_fallthru
          _
        // Predicated region
        $region41: #{tpu_custom_call.1} parent=31 // pred_check
          %p301 = pneg %p125
        $region42: #{tpu_custom_call.1} parent=31 // pred_check_branch
          %303 = sbr.rel (%p301) target = $region44
        $region43: #{tpu_custom_call.1} parent=31 // pred_region
          %p304 = scmp.lt.s32.totalorder %s25, 1
          %s305 = scalar_select %p304, %s25, 1
          %s306 = smul.addr %s305, 4
          %s307 = smul.addr %s306, 8
          %s308 = scalar_lea.vmem %s3, %s307
        $region44: #{tpu_custom_call.1} parent=31 // pred_fallthru
          _
      $region32: #{tpu_custom_call.1} parent=5 // pred_fallthru
        _
      %p309 = scmp.le.s32.totalorder 1, %s18
      %p310 = scmp.lt.s32.totalorder %s18, 5
      %p311 = pnand %p309, %p310
      %p312 = pneg %p311
      // Predicated region
      $region45: #{tpu_custom_call.1} parent=5 // pred_check
        _
      $region46: #{tpu_custom_call.1} parent=5 // pred_check_branch
        %314 = sbr.rel (%p311) target = $region48
      $region47: #{tpu_custom_call.1} parent=5 // pred_region
        %s315 = ssub.s32 %s18, 1
        %p316 = scmp.lt.s32.totalorder %s27, 1
        %s317 = scalar_select %p316, %s27, 1
        %p318 = scmp.lt.s32.totalorder %s28, 1
        %s319 = scalar_select %p318, %s28, 1
        %s320 = smul.addr %s319, 4
        %s321 = smul.addr %s317, 8
        %s322 = sadd.s32 %s320, %s321
        %s323 = smul.addr %s322, 8
        %s324 = scalar_lea.vmem %s0, %s323
        %p325 = pneg %p58
        %p326 = pneg %p55
        %p327 = pneg %p79
        %p328 = pneg %p76
        %p329 = scmp.lt.s32.totalorder %s27, 1
        %s330 = scalar_select %p329, %s27, 1
        %s331 = smul.addr %s330, 4
        %s332 = smul.addr %s331, 8
        %s333 = scalar_lea.vmem %s2, %s332
        %p334 = pneg %p105
        %p335 = pneg %p102
        %p336 = scmp.lt.s32.totalorder %s27, 1
        %s337 = scalar_select %p336, %s27, 1
        %s338 = smul.addr %s337, 4
        %s339 = smul.addr %s338, 8
        %s340 = scalar_lea.vmem %s3, %s339
        %p341 = pneg %p131
        %p342 = pneg %p128
        %p343 = pneg %p152
        %p344 = pneg %p149
        %p345 = pneg %p173
        %p346 = pneg %p170
        %p347 = pneg %p194
        %p348 = pneg %p191
        %p349 = pneg %p222
        %p350 = pneg %p219
        %s351 = sand.u32 %s209, 1
        %s352 = scalar_lea.sflag [#allocation3], %s351
        %s353 = sand.u32 %s209, 1
        %s354 = smul.addr %s353, 64
        %s355 = scalar_lea.vmem [#allocation2], %s354
        %p356 = pneg %p250
        %p357 = pneg %p247
        %p358 = scmp.lt.s32.totalorder %s27, 1
        %s359 = scalar_select %p358, %s27, 1
        %p360 = scmp.lt.s32.totalorder %s28, 1
        %s361 = scalar_select %p360, %s28, 1
        %s362 = smul.addr %s361, 6
        %s363 = smul.addr %s359, 12
        %s364 = sadd.s32 %s362, %s363
        %s365 = smul.addr %s364, 8
        %s366 = scalar_lea.vmem %s8, %s365
        %p367 = scmp.lt.s32.totalorder %s27, 1
        %s368 = scalar_select %p367, %s27, 1
        %p369 = scmp.lt.s32.totalorder %s28, 1
        %s370 = scalar_select %p369, %s28, 1
        %s371 = smul.addr %s370, 4
        %s372 = smul.addr %s368, 8
        %s373 = sadd.s32 %s371, %s372
        %s374 = smul.addr %s373, 8
        %s375 = scalar_lea.vmem %s0, %s374
        %p376 = scmp.lt.s32.totalorder %s27, 1
        %s377 = scalar_select %p376, %s27, 1
        %s378 = smul.addr %s377, 4
        %s379 = smul.addr %s378, 8
        %s380 = scalar_lea.vmem %s2, %s379
        %p381 = scmp.lt.s32.totalorder %s27, 1
        %s382 = scalar_select %p381, %s27, 1
        %s383 = smul.addr %s382, 4
        %s384 = smul.addr %s383, 8
        %s385 = scalar_lea.vmem %s3, %s384
        %p386 = scmp.lt.s32.totalorder %s27, 1
        %s387 = scalar_select %p386, %s27, 1
        %p388 = scmp.lt.s32.totalorder %s28, 1
        %s389 = scalar_select %p388, %s28, 1
        %s390 = smul.addr %s389, 6
        %s391 = smul.addr %s387, 12
        %s392 = sadd.s32 %s390, %s391
        %s393 = smul.addr %s392, 8
        %s394 = scalar_lea.vmem %s8, %s393
        %p395 = scmp.eq.s32.totalorder %s27, 1
        %s396 = scalar_select %p395, 0.015625, 0.00390625
        %s397 = scalar_select %p395, 192.0, 0.0
        %v398 = vld [vmem:[%s1] sm:$0xff]
        %v399 = vld [vmem:[%s1 + $0x8] sm:$0xff]
        %v400 = vld [vmem:[%s1 + $0x10] sm:$0xff]
        %v401 = vld [vmem:[%s1 + $0x18] sm:$0xff]
        %v402 = vld [vmem:[%s375] sm:$0xff]
        %v403 = vld [vmem:[%s375 + $0x8] sm:$0xff]
        %v404 = vld [vmem:[%s375 + $0x10] sm:$0xf]
        %v405 = vld [vmem:[%s375 + $0x18] sm:$0xf]
        %vm406 = vcmask 97280
        %v408 = vsel %vm406, %v398, 0
        %v411 = vsel %vm406, %v399, 0
        %v414 = vsel %vm406, %v400, 0
        %v417 = vsel %vm406, %v401, 0
        %vm419 = vcmask 1043456
        %v421 = vsel %vm419, %v404, 0
        %v424 = vsel %vm419, %v405, 0
        %426 = vmatprep.subr.mxu0 %v403
        %427 = vmatpush1.msra.mxu0 %v402
        %428 = vmatprep.subr.mxu0 %v424
        %429 = vmatpush1.msra.mxu0 %v421
        %430 = vmatprep.subr.mxu0 0.0
        %431 = vmatpush1.msra.mxu0 0.0
        %432 = vmatprep.subr.mxu0 0.0
        %433 = vmatpush1.msra.mxu0 0.0
        %434 = vmatprep.subr.mxu0 0.0
        %435 = vmatpush1.msra.mxu0 0.0
        %436 = vmatprep.subr.mxu0 0.0
        %437 = vmatpush1.msra.mxu0 0.0
        %438 = vmatprep.subr.mxu0 0.0
        %439 = vmatpush1.msra.mxu0 0.0
        %440 = vmatprep.subr.mxu0 0.0
        %441 = vmatpush1.msra.mxu0 0.0
        %442 = vmatprep.subr.mxu0 0.0
        %443 = vmatpush1.msra.mxu0 0.0
        %444 = vmatprep.subr.mxu0 0.0
        %445 = vmatpush1.msra.mxu0 0.0
        %446 = vmatprep.subr.mxu0 0.0
        %447 = vmatpush1.msra.mxu0 0.0
        %448 = vmatprep.subr.mxu0 0.0
        %449 = vmatpush1.msra.mxu0 0.0
        %450 = vmatprep.subr.mxu0 0.0
        %451 = vmatpush1.msra.mxu0 0.0
        %452 = vmatprep.subr.mxu0 0.0
        %453 = vmatpush1.msra.mxu0 0.0
        %454 = vmatprep.subr.mxu0 0.0
        %455 = vmatpush1.msra.mxu0 0.0
        %456 = vmatprep.subr.mxu0 0.0
        %457 = vmatpush1.msra.mxu0 0.0
        %458 = vmatprep.subr.mxu0 0.0
        %459 = vmatpush1.msra.mxu0 0.0
        %460 = vmatprep.subr.mxu0 0.0
        %461 = vmatpush1.msra.mxu0 0.0
        %462 = vmatprep.subr.mxu0 0.0
        %463 = vmatpush1.msra.mxu0 0.0
        %464 = vmatprep.subr.mxu0 0.0
        %465 = vmatpush1.msra.mxu0 0.0
        %466 = vmatprep.subr.mxu0 0.0
        %467 = vmatpush1.msra.mxu0 0.0
        %468 = vmatprep.subr.mxu0 0.0
        %469 = vmatpush1.msra.mxu0 0.0
        %470 = vmatprep.subr.mxu0 0.0
        %471 = vmatpush1.msra.mxu0 0.0
        %472 = vmatprep.subr.mxu0 0.0
        %473 = vmatpush1.msra.mxu0 0.0
        %474 = vmatprep.subr.mxu0 0.0
        %475 = vmatpush1.msra.mxu0 0.0
        %476 = vmatprep.subr.mxu0 0.0
        %477 = vmatpush1.msra.mxu0 0.0
        %478 = vmatprep.subr.mxu0 0.0
        %479 = vmatpush1.msra.mxu0 0.0
        %480 = vmatprep.subr.mxu0 0.0
        %481 = vmatpush1.msra.mxu0 0.0
        %482 = vmatprep.subr.mxu0 0.0
        %483 = vmatpush1.msra.mxu0 0.0
        %484 = vmatprep.subr.mxu0 0.0
        %485 = vmatpush1.msra.mxu0 0.0
        %486 = vmatprep.subr.mxu0 0.0
        %487 = vmatpush1.msra.mxu0 0.0
        %488 = vmatprep.subr.mxu0 0.0
        %489 = vmatpush1.msra.mxu0 0.0
        %490 = vmatprep.mubr.f32.mxu0 0.0
        %491 = vmatmul.mubr.f32.gmra.mrb[0].mxu0 %v408
        %v492 = vpop.f32.mrb[0].mxu0
        %v493 = vadd.f32 0.0, %v492
        %v494 = vpop.f32.mrb[0].mxu0
        %v495 = vadd.f32 0.0, %v494
        %496 = vmatprep.mubr.f32.mxu0 0.0
        %497 = vmatmul.mubr.f32.gmra.mrb[0].mxu0 %v411
        %v498 = vpop.f32.mrb[0].mxu0
        %v499 = vadd.f32 0.0, %v498
        %v500 = vpop.f32.mrb[0].mxu0
        %v501 = vadd.f32 0.0, %v500
        %502 = vmatprep.mubr.f32.mxu0 0.0
        %503 = vmatmul.mubr.f32.gmra.mrb[0].mxu0 %v414
        %v504 = vpop.f32.mrb[0].mxu0
        %v505 = vadd.f32 0.0, %v504
        %v506 = vpop.f32.mrb[0].mxu0
        %v507 = vadd.f32 0.0, %v506
        %508 = vmatprep.mubr.f32.mxu0 0.0
        %509 = vmatmul.mubr.f32.gmra.mrb[0].mxu0 %v417
        %v510 = vpop.f32.mrb[0].mxu0
        %v511 = vadd.f32 0.0, %v510
        %v512 = vpop.f32.mrb[0].mxu0
        %v513 = vadd.f32 0.0, %v512
        %514 = vdwg.mxu0
        %v515 = vadd.f32 %v493, %v495
        %516 = vadd.xlane.f32.xlu0 %v515
        %v517 = vpop.xlane.xlu0 %516
        %v518 = vadd.f32 %v499, %v501
        %519 = vadd.xlane.f32.xlu0 %v518
        %v520 = vpop.xlane.xlu0 %519
        %v521 = vadd.f32 %v505, %v507
        %522 = vadd.xlane.f32.xlu0 %v521
        %v523 = vpop.xlane.xlu0 %522
        %v524 = vadd.f32 %v511, %v513
        %525 = vadd.xlane.f32.xlu0 %v524
        %v526 = vpop.xlane.xlu0 %525
        %v527 = vstv %s396
        %v528 = vmul.f32 %v517, %v527
        %v529 = vmul.f32 %v520, %v527
        %v530 = vmul.f32 %v523, %v527
        %v531 = vmul.f32 %v526, %v527
        %v532 = vsub.f32 %v493, %v528
        %v533 = vsub.f32 %v495, %v528
        %v534 = vsub.f32 %v499, %v529
        %v535 = vsub.f32 %v501, %v529
        %v536 = vsub.f32 %v505, %v530
        %v537 = vsub.f32 %v507, %v530
        %v538 = vsub.f32 %v511, %v531
        %v539 = vsub.f32 %v513, %v531
        %v540 = vmul.f32 %v532, %v532
        %v541 = vmul.f32 %v533, %v533
        %v542 = vmul.f32 %v534, %v534
        %v543 = vmul.f32 %v535, %v535
        %v544 = vmul.f32 %v536, %v536
        %v545 = vmul.f32 %v537, %v537
        %v546 = vmul.f32 %v538, %v538
        %v547 = vmul.f32 %v539, %v539
        %v548 = vadd.f32 %v540, %v541
        %549 = vadd.xlane.f32.xlu0 %v548
        %v550 = vpop.xlane.xlu0 %549
        %v551 = vadd.f32 %v542, %v543
        %552 = vadd.xlane.f32.xlu0 %v551
        %v553 = vpop.xlane.xlu0 %552
        %v554 = vadd.f32 %v544, %v545
        %555 = vadd.xlane.f32.xlu0 %v554
        %v556 = vpop.xlane.xlu0 %555
        %v557 = vadd.f32 %v546, %v547
        %558 = vadd.xlane.f32.xlu0 %v557
        %v559 = vpop.xlane.xlu0 %558
        %v560 = vmul.f32 %v528, %v528
        %v561 = vmul.f32 %v529, %v529
        %v562 = vmul.f32 %v530, %v530
        %v563 = vmul.f32 %v531, %v531
        %v564 = vstv %s397
        %v565 = vmul.f32 %v564, %v560
        %v566 = vmul.f32 %v564, %v561
        %v567 = vmul.f32 %v564, %v562
        %v568 = vmul.f32 %v564, %v563
        %v569 = vsub.f32 %v550, %v565
        %v570 = vsub.f32 %v553, %v566
        %v571 = vsub.f32 %v556, %v567
        %v572 = vsub.f32 %v559, %v568
        %v573 = vmul.f32 %v569, %v527
        %v574 = vmul.f32 %v570, %v527
        %v575 = vmul.f32 %v571, %v527
        %v576 = vmul.f32 %v572, %v527
        %v577 = vmax.f32 %v573, 0.0
        %v578 = vmax.f32 %v574, 0.0
        %v579 = vmax.f32 %v575, 0.0
        %v580 = vmax.f32 %v576, 0.0
        %v581 = vadd.f32 %v577, 1e-05
        %v582 = vadd.f32 %v578, 1e-05
        %v583 = vadd.f32 %v579, 1e-05
        %v584 = vadd.f32 %v580, 1e-05
        %v585 = vrsqrt.pop %v581
        %v586 = vrsqrt.pop %v582
        %v587 = vrsqrt.pop %v583
        %v588 = vrsqrt.pop %v584
        %v589 = vld [vmem:[%s380] sm:$0xff]
        %v590 = vld [vmem:[%s380 + $0x8] sm:$0xff]
        %v591 = vld [vmem:[%s380 + $0x10] sm:$0xff]
        %v592 = vld [vmem:[%s380 + $0x18] sm:$0xff]
        %v593 = vmul.f32 %v585, %v589
        %v594 = vmul.f32 %v586, %v590
        %v595 = vmul.f32 %v587, %v591
        %v596 = vmul.f32 %v588, %v592
        %598 = vset.pattern.permute.xlu0 0
        %599 = vperm.xlu0 %598, %v593
        %v600 = vpop.permute.xlu0 %599
        %603 = vset.pattern.permute.xlu0 0
        %604 = vperm.xlu0 %603, %v594
        %v605 = vpop.permute.xlu0 %604
        %608 = vset.pattern.permute.xlu0 0
        %609 = vperm.xlu0 %608, %v595
        %v610 = vpop.permute.xlu0 %609
        %613 = vset.pattern.permute.xlu0 0
        %614 = vperm.xlu0 %613, %v596
        %v615 = vpop.permute.xlu0 %614
        %v617 = vmul.f32 %v532, %v600
        %v618 = vmul.f32 %v533, %v600
        %v619 = vmul.f32 %v534, %v605
        %v620 = vmul.f32 %v535, %v605
        %v621 = vmul.f32 %v536, %v610
        %v622 = vmul.f32 %v537, %v610
        %v623 = vmul.f32 %v538, %v615
        %v624 = vmul.f32 %v539, %v615
        %v625 = vld [vmem:[%s385] sm:$0xff]
        %v626 = vld [vmem:[%s385 + $0x8] sm:$0xff]
        %v627 = vld [vmem:[%s385 + $0x10] sm:$0xff]
        %v628 = vld [vmem:[%s385 + $0x18] sm:$0xff]
        %630 = vset.pattern.permute.xlu0 0
        %631 = vperm.xlu0 %630, %v625
        %v632 = vpop.permute.xlu0 %631
        %635 = vset.pattern.permute.xlu0 0
        %636 = vperm.xlu0 %635, %v626
        %v637 = vpop.permute.xlu0 %636
        %640 = vset.pattern.permute.xlu0 0
        %641 = vperm.xlu0 %640, %v627
        %v642 = vpop.permute.xlu0 %641
        %645 = vset.pattern.permute.xlu0 0
        %646 = vperm.xlu0 %645, %v628
        %v647 = vpop.permute.xlu0 %646
        %v649 = vadd.f32 %v617, %v632
        %v650 = vadd.f32 %v618, %v632
        %v651 = vadd.f32 %v619, %v637
        %v652 = vadd.f32 %v620, %v637
        %v653 = vadd.f32 %v621, %v642
        %v654 = vadd.f32 %v622, %v642
        %v655 = vadd.f32 %v623, %v647
        %v656 = vadd.f32 %v624, %v647
        %657 = vst [vmem:[%s355] sm:$0xff] %v649
        %658 = vst [vmem:[%s355 + $0x8] sm:$0xff] %v650
        %659 = vst [vmem:[%s355 + $0x10] sm:$0xff] %v651
        %660 = vst [vmem:[%s355 + $0x18] sm:$0xff] %v652
        %661 = vst [vmem:[%s355 + $0x20] sm:$0xff] %v653
        %662 = vst [vmem:[%s355 + $0x28] sm:$0xff] %v654
        %663 = vst [vmem:[%s355 + $0x30] sm:$0xff] %v655
        %664 = vst [vmem:[%s355 + $0x38] sm:$0xff] %v656
        %v665 = vld [vmem:[%s4] sm:$0xff]
        %v666 = vld [vmem:[%s4 + $0x8] sm:$0xff]
        %v667 = vld [vmem:[%s4 + $0x10] sm:$0xff]
        %v668 = vld [vmem:[%s4 + $0x18] sm:$0xff]
        %v669 = vld [vmem:[%s4 + $0x20] sm:$0xff]
        %v670 = vld [vmem:[%s4 + $0x28] sm:$0xff]
        %v671 = vld [vmem:[%s5] sm:$0xff]
        %v672 = vld [vmem:[%s5 + $0x8] sm:$0xff]
        %v673 = vld [vmem:[%s5 + $0x10] sm:$0xff]
        %v674 = vld [vmem:[%s5 + $0x18] sm:$0xff]
        %v675 = vld [vmem:[%s5 + $0x20] sm:$0x3]
        %v676 = vld [vmem:[%s6] sm:$0x1]
        %v678 = vlaneseq
        %v679 = vshrl.u32 %v678, 7
        %v680 = vsub.s32 0, %v679
        %v681 = vrot.slane %v676, %v680
        %vm683 = vcmask 277504
        %v685 = vsel %vm683, %v665, 0
        %v688 = vsel %vm683, %v666, 0
        %v691 = vsel %vm683, %v667, 0
        %v694 = vsel %vm683, %v668, 0
        %v697 = vsel %vm683, %v669, 0
        %v700 = vsel %vm683, %v670, 0
        %vm702 = vcmask 1041408
        %v704 = vsel %vm702, %v675, 0
        %706 = vmatprep.subr.mxu0 0.0
        %707 = vmatpush1.msra.mxu0 %v671
        %708 = vmatprep.subr.mxu0 0.0
        %709 = vmatpush1.msra.mxu0 %v672
        %710 = vmatprep.subr.mxu0 0.0
        %711 = vmatpush1.msra.mxu0 %v673
        %712 = vmatprep.subr.mxu0 0.0
        %713 = vmatpush1.msra.mxu0 %v674
        %714 = vmatprep.subr.mxu0 0.0
        %715 = vmatpush1.msra.mxu0 %v704
        %716 = vmatprep.subr.mxu0 0.0
        %717 = vmatpush1.msra.mxu0 0.0
        %718 = vmatprep.subr.mxu0 0.0
        %719 = vmatpush1.msra.mxu0 0.0
        %720 = vmatprep.subr.mxu0 0.0
        %721 = vmatpush1.msra.mxu0 0.0
        %722 = vmatprep.subr.mxu0 0.0
        %723 = vmatpush1.msra.mxu0 0.0
        %724 = vmatprep.subr.mxu0 0.0
        %725 = vmatpush1.msra.mxu0 0.0
        %726 = vmatprep.subr.mxu0 0.0
        %727 = vmatpush1.msra.mxu0 0.0
        %728 = vmatprep.subr.mxu0 0.0
        %729 = vmatpush1.msra.mxu0 0.0
        %730 = vmatprep.subr.mxu0 0.0
        %731 = vmatpush1.msra.mxu0 0.0
        %732 = vmatprep.subr.mxu0 0.0
        %733 = vmatpush1.msra.mxu0 0.0
        %734 = vmatprep.subr.mxu0 0.0
        %735 = vmatpush1.msra.mxu0 0.0
        %736 = vmatprep.subr.mxu0 0.0
        %737 = vmatpush1.msra.mxu0 0.0
        %738 = vmatprep.subr.mxu0 0.0
        %739 = vmatpush1.msra.mxu0 0.0
        %740 = vmatprep.subr.mxu0 0.0
        %741 = vmatpush1.msra.mxu0 0.0
        %742 = vmatprep.subr.mxu0 0.0
        %743 = vmatpush1.msra.mxu0 0.0
        %744 = vmatprep.subr.mxu0 0.0
        %745 = vmatpush1.msra.mxu0 0.0
        %746 = vmatprep.subr.mxu0 0.0
        %747 = vmatpush1.msra.mxu0 0.0
        %748 = vmatprep.subr.mxu0 0.0
        %749 = vmatpush1.msra.mxu0 0.0
        %750 = vmatprep.subr.mxu0 0.0
        %751 = vmatpush1.msra.mxu0 0.0
        %752 = vmatprep.subr.mxu0 0.0
        %753 = vmatpush1.msra.mxu0 0.0
        %754 = vmatprep.subr.mxu0 0.0
        %755 = vmatpush1.msra.mxu0 0.0
        %756 = vmatprep.subr.mxu0 0.0
        %757 = vmatpush1.msra.mxu0 0.0
        %758 = vmatprep.subr.mxu0 0.0
        %759 = vmatpush1.msra.mxu0 0.0
        %760 = vmatprep.subr.mxu0 0.0
        %761 = vmatpush1.msra.mxu0 0.0
        %762 = vmatprep.subr.mxu0 0.0
        %763 = vmatpush1.msra.mxu0 0.0
        %764 = vmatprep.subr.mxu0 0.0
        %765 = vmatpush1.msra.mxu0 0.0
        %766 = vmatprep.subr.mxu0 0.0
        %767 = vmatpush1.msra.mxu0 0.0
        %768 = vmatprep.subr.mxu0 0.0
        %769 = vmatpush1.msra.mxu0 0.0
        %770 = vmatprep.mubr.f32.mxu0 0.0
        %771 = vmatmul.mubr.f32.gmra.mrb[0].mxu0 %v685
        %v772 = vpop.f32.mrb[0].mxu0
        %v773 = vadd.f32 %v681, %v772
        %v774 = vpop.f32.mrb[0].mxu0
        %775 = vmatprep.mubr.f32.mxu0 0.0
        %776 = vmatmul.mubr.f32.gmra.mrb[0].mxu0 %v688
        %v777 = vpop.f32.mrb[0].mxu0
        %v778 = vadd.f32 %v681, %v777
        %v779 = vpop.f32.mrb[0].mxu0
        %780 = vmatprep.mubr.f32.mxu0 0.0
        %781 = vmatmul.mubr.f32.gmra.mrb[0].mxu0 %v691
        %v782 = vpop.f32.mrb[0].mxu0
        %v783 = vadd.f32 %v681, %v782
        %v784 = vpop.f32.mrb[0].mxu0
        %785 = vmatprep.mubr.f32.mxu0 0.0
        %786 = vmatmul.mubr.f32.gmra.mrb[0].mxu0 %v694
        %v787 = vpop.f32.mrb[0].mxu0
        %v788 = vadd.f32 %v681, %v787
        %v789 = vpop.f32.mrb[0].mxu0
        %790 = vmatprep.mubr.f32.mxu0 0.0
        %791 = vmatmul.mubr.f32.gmra.mrb[0].mxu0 %v697
        %v792 = vpop.f32.mrb[0].mxu0
        %v793 = vadd.f32 %v681, %v792
        %v794 = vpop.f32.mrb[0].mxu0
        %795 = vmatprep.mubr.f32.mxu0 0.0
        %796 = vmatmul.mubr.f32.gmra.mrb[0].mxu0 %v700
        %v797 = vpop.f32.mrb[0].mxu0
        %v798 = vadd.f32 %v681, %v797
        %v799 = vpop.f32.mrb[0].mxu0
        %800 = vdwg.mxu0
        %vm801 = vcmask 146432
        %802 = vst.msk [vmem:[%s394] sm:$0xff] %vm801, %v773
        %803 = vst.msk [vmem:[%s394 + $0x8] sm:$0xff] %vm801, %v778
        %804 = vst.msk [vmem:[%s394 + $0x10] sm:$0xff] %vm801, %v783
        %805 = vst.msk [vmem:[%s394 + $0x18] sm:$0xff] %vm801, %v788
        %806 = vst.msk [vmem:[%s394 + $0x20] sm:$0xff] %vm801, %v793
        %807 = vst.msk [vmem:[%s394 + $0x28] sm:$0xff] %vm801, %v798
        %s808 = sand.u32 %s209, 1
        %s809 = scalar_lea.sflag [#allocation3], %s808
        %s810 = sand.u32 %s209, 1
        %s811 = smul.addr %s810, 64
        %s812 = scalar_lea.vmem [#allocation2], %s811
        %p813 = scmp.lt.s32.totalorder %s27, 1
        %s814 = scalar_select %p813, %s27, 1
        %p815 = scmp.lt.s32.totalorder %s28, 1
        %s816 = scalar_select %p815, %s28, 1
        %s817 = smul.addr %s816, 6
        %s818 = smul.addr %s814, 12
        %s819 = sadd.s32 %s817, %s818
        %s820 = smul.addr %s819, 8
        %s821 = scalar_lea.vmem %s8, %s820
        // Predicated region
        $region49: #{tpu_custom_call.1} parent=47 // pred_check
          %p822 = pneg %p219
        $region50: #{tpu_custom_call.1} parent=47 // pred_check_branch
          %824 = sbr.rel (%p822) target = $region52
        $region51: #{tpu_custom_call.1} parent=47 // pred_region
          %s826 = ssub.s32 1024, 1024
          %827 = vsyncadd %s809, %s826
          %s828 = smul.addr %s28, 8
          %s829 = smul.addr %s27, 16
          %s830 = sadd.s32 %s828, %s829
          %s831 = smul.addr %s830, 128
          %s832 = scalar_lea.hbm %s7, %s831
          %s833 = sshll.u32 %s812, 4
          %s834 = int_to_ptr.vmem [resolvable:$true] %s833
          %839 = dma.vmem_to_hbm [thread:$0]  %s834, 1024, %s832, %s809, 256, 256, 16
        $region52: #{tpu_custom_call.1} parent=47 // pred_fallthru
          _
        // Predicated region
        $region53: #{tpu_custom_call.1} parent=47 // pred_check
          %p840 = pneg %p247
        $region54: #{tpu_custom_call.1} parent=47 // pred_check_branch
          %842 = sbr.rel (%p840) target = $region56
        $region55: #{tpu_custom_call.1} parent=47 // pred_region
          _
        $region56: #{tpu_custom_call.1} parent=47 // pred_fallthru
          _
      $region48: #{tpu_custom_call.1} parent=5 // pred_fallthru
        _
      %p843 = scmp.le.s32.totalorder 2, %s18
      // Predicated region
      $region57: #{tpu_custom_call.1} parent=5 // pred_check
        %p844 = pneg %p843
      $region58: #{tpu_custom_call.1} parent=5 // pred_check_branch
        %846 = sbr.rel (%p844) target = $region60
      $region59: #{tpu_custom_call.1} parent=5 // pred_region
        %s847 = ssub.s32 %s18, 2
        // Predicated region
        $region61: #{tpu_custom_call.1} parent=59 // pred_check
          %p848 = pneg %p225
        $region62: #{tpu_custom_call.1} parent=59 // pred_check_branch
          %850 = sbr.rel (%p848) target = $region64
        $region63: #{tpu_custom_call.1} parent=59 // pred_region
          %s851 = sand.u32 %s210, 1
          %s852 = scalar_lea.sflag [#allocation3], %s851
          %s853 = sand.u32 %s210, 1
          %s854 = smul.addr %s853, 64
          %s855 = scalar_lea.vmem [#allocation2], %s854
          %856 = dma.done %s852, 1024
        $region64: #{tpu_custom_call.1} parent=59 // pred_fallthru
          _
        // Predicated region
        $region65: #{tpu_custom_call.1} parent=59 // pred_check
          %p857 = pneg %p253
        $region66: #{tpu_custom_call.1} parent=59 // pred_check_branch
          %859 = sbr.rel (%p857) target = $region68
        $region67: #{tpu_custom_call.1} parent=59 // pred_region
          %p860 = scmp.lt.s32.totalorder %s29, 1
          %s861 = scalar_select %p860, %s29, 1
          %p862 = scmp.lt.s32.totalorder %s30, 1
          %s863 = scalar_select %p862, %s30, 1
          %s864 = smul.addr %s863, 6
          %s865 = smul.addr %s861, 12
          %s866 = sadd.s32 %s864, %s865
          %s867 = smul.addr %s866, 8
          %s868 = scalar_lea.vmem %s8, %s867
        $region68: #{tpu_custom_call.1} parent=59 // pred_fallthru
          _
      $region60: #{tpu_custom_call.1} parent=5 // pred_fallthru
        _
    $region6: #{tpu_custom_call.1} parent=1 // loop_footer
      %s22 = sadd.s32 1, %s18
    $region7: #{tpu_custom_call.1} parent=1 // loop_footer_branch
      %17 = sbr.rel target = $region3
    $region8: #{tpu_custom_call.1} parent=1 // loop_exit
      _
    %869 = vsyncpa [#allocation3], 1
    %s870 = scalar_lea.sflag [#allocation3], 1
    %871 = vsyncpa %s870, 1

</llo_original>
